<compile_context>
chip_gen: v5e
topology: v5e:2x2
jax: 0.10.0
libtpu: 0.0.40
codegen_flags: <defaults>
</compile_context>

<pallas_src>
import functools

import jax
import jax.numpy as jnp
from jax import lax
from jax.experimental import pallas as pl
from jax.experimental.pallas import tpu as pltpu


def _round_up(x, m):
    return ((x + m - 1) // m) * m


# ---------------------------------------------------------------------------
# Kernels
# ---------------------------------------------------------------------------

def _linear_embed_kernel(x_ref, w_ref, b_ref, o_ref, *, l2norm_embed):
    # x_ref: (tm, K)   w_ref: (K, Dp) [pre-transposed in the wrapper]
    # b_ref: (1, Dp)   o_ref: (tm, Dp)
    y = lax.dot_general(
        x_ref[...], w_ref[...],
        dimension_numbers=(((1,), (0,)), ((), ())),
        preferred_element_type=jnp.float32)
    y = y + b_ref[...].astype(jnp.float32)
    if l2norm_embed:
        # F.normalize(t, dim=-1) == t / max(||t||, 1e-12) == t*rsqrt(max(||t||^2,1e-24))
        norm_sq = jnp.sum(y * y, axis=-1, keepdims=True)
        y = y * lax.rsqrt(jnp.maximum(norm_sq, 1e-24))
    o_ref[...] = y.astype(o_ref.dtype)


def _linear_embed_kernel_ktiled(x_ref, w_ref, b_ref, o_ref, acc_ref, *,
                                l2norm_embed):
    # Same as above, but with a K-reduction grid axis (axis 1, "arbitrary"):
    # x_ref: (tm, tk)   w_ref: (tk, Dp)   acc_ref: (tm, Dp) f32 scratch.
    k = pl.program_id(1)

    @pl.when(k == 0)
    def _():
        acc_ref[...] = jnp.zeros_like(acc_ref)

    acc_ref[...] += lax.dot_general(
        x_ref[...], w_ref[...],
        dimension_numbers=(((1,), (0,)), ((), ())),
        preferred_element_type=jnp.float32)

    @pl.when(k == pl.num_programs(1) - 1)
    def _():
        y = acc_ref[...] + b_ref[...].astype(jnp.float32)
        if l2norm_embed:
            norm_sq = jnp.sum(y * y, axis=-1, keepdims=True)
            y = y * lax.rsqrt(jnp.maximum(norm_sq, 1e-24))
        o_ref[...] = y.astype(o_ref.dtype)


# ---------------------------------------------------------------------------
# Tile / VMEM sizing
# ---------------------------------------------------------------------------

def _vmem_budget_bytes():
    try:
        info = pltpu.get_tpu_info()
        cap = getattr(info, "vmem_capacity_bytes", None)
        if cap:
            return int(0.75 * cap)          # headroom for Mosaic scratch / spill
    except Exception:
        pass
    return 48 << 20                          # conservative: safe on v7x (64 MiB/TC)


def _estimate_vmem(tm, tk, k_tiles, n_tiles, dim_p, x_bytes, w_bytes, o_bytes):
    w_bufs = 1 if k_tiles == 1 else 2        # invariant weight is single-buffered
    x_bufs = 3 if (k_tiles == 1 and n_tiles > 2
                   and tm * tk * x_bytes <= (2 << 20)) else 2
    return (x_bufs * tm * tk * x_bytes
            + w_bufs * tk * dim_p * w_bytes
            + 2 * dim_p * 4
            + 2 * tm * dim_p * o_bytes
            + tm * dim_p * 4)                # f32 intermediate / accumulator


def _pick_tiles(n, K, dim_p, x_bytes, w_bytes, o_bytes, budget, tk_req=None):
    avail = max(budget - (4 << 20), 8 << 20)

    tm_cands = [t for t in (1024, 768, 512, 384, 256, 128, 64, 32, 16, 8) if t <= n]
    if not tm_cands:
        tm_cands = [max(n, 1)]               # tiny n: one full block (== array dim)

    def fits(tm, tk, k_tiles):
        return _estimate_vmem(tm, tk, k_tiles, pl.cdiv(n, tm), dim_p,
                              x_bytes, w_bytes, o_bytes) <= avail

    def pick_tm(tk, k_tiles):
        for t in tm_cands:
            if fits(t, tk, k_tiles):
                return t
        return tm_cands[-1]

    if tk_req is not None and tk_req < K:
        tk = max(128, _round_up(tk_req, 128))
        return pick_tm(tk, 2), tk

    # Prefer keeping the whole K resident (no reduction axis).
    if K <= 256 or fits(tm_cands[-1], K, 1):
        return pick_tm(K, 1), K

    # Need a K-reduction axis: prefer tile sizes dividing K (no K pad needed).
    tks = [t for t in (2048, 1024, 512, 256, 128) if t < K]
    tks = [t for t in tks if K % t == 0] + [t for t in tks if K % t != 0]
    for tk in tks:
        if fits(tm_cands[-1], tk, 2):
            return pick_tm(tk, 2), tk
    return pick_tm(128, 2), 128


# ---------------------------------------------------------------------------
# Wrapper
# ---------------------------------------------------------------------------

def linear_embedding(x, weight, bias, *, l2norm_embed=False,
                     compute_dtype=None, tk=None):
    """x: (..., input_dim); weight: (dim, input_dim) [PyTorch layout]; bias: (dim,)."""
    input_dim = x.shape[-1]
    dim = weight.shape[0]
    lead_shape = x.shape[:-1]
    n = 1
    for s in lead_shape:
        n *= s
    out_dtype = x.dtype

    # Optional opt-in downcast of MXU inputs (f32 accumulation kept in-kernel).
    if compute_dtype is not None:
        x = x.astype(compute_dtype)
        weight = weight.astype(compute_dtype)

    x2d = x.reshape(n, input_dim)
    w_t = weight.T                            # one-time wrapper transpose -> (K, dim)

    # Lane-dense output only for narrow feature dims (zero pad keeps the
    # linear output and the l2norm exact); wider dims keep masked stores.
    pad_dim = (dim % 128 != 0) and (dim < 256)
    dim_p = _round_up(dim, 128) if pad_dim else dim
    if pad_dim:
        w_t = jnp.pad(w_t, ((0, 0), (0, dim_p - dim)))
        bias = jnp.pad(bias, (0, dim_p - dim))
    b2d = bias.reshape(1, dim_p)

    x_bytes = jnp.dtype(x2d.dtype).itemsize
    w_bytes = jnp.dtype(w_t.dtype).itemsize
    o_bytes = jnp.dtype(out_dtype).itemsize

    budget = _vmem_budget_bytes()
    tm, tk_eff = _pick_tiles(n, input_dim, dim_p, x_bytes, w_bytes, o_bytes,
                             budget, tk_req=tk)

    if tk_eff < input_dim:
        # K-reduction axis: every K tile must be full (garbage K columns would
        # contaminate the accumulator), so pad K with zeros if needed.
        k_pad = _round_up(input_dim, tk_eff)
        if k_pad != input_dim:
            x2d = jnp.pad(x2d, ((0, 0), (0, k_pad - input_dim)))
            w_t = jnp.pad(w_t, ((0, k_pad - input_dim), (0, 0)))
        k_tiles = k_pad // tk_eff
    else:
        tk_eff = input_dim
        k_tiles = 1

    n_tiles = pl.cdiv(n, tm)
    deep_x = (k_tiles == 1 and n_tiles > 2
              and tm * tk_eff * x_bytes <= (2 << 20))

    vmem_est = _estimate_vmem(tm, tk_eff, k_tiles, n_tiles, dim_p,
                              x_bytes, w_bytes, o_bytes)
    vmem_limit = int(min(budget, max(32 << 20, vmem_est + (4 << 20))))

    cost = pl.CostEstimate(
        flops=2 * n * input_dim * dim,
        transcendentals=(n if l2norm_embed else 0),
        bytes_accessed=(n * input_dim * x_bytes
                        + dim * input_dim * w_bytes
                        + dim * 4
                        + n * dim * o_bytes))

    def _call(use_hints):
        def bs(shape, imap, mode=None):
            if use_hints and mode is not None:
                return pl.BlockSpec(shape, imap, pipeline_mode=mode)
            return pl.BlockSpec(shape, imap)

        if k_tiles == 1:
            kernel = functools.partial(_linear_embed_kernel,
                                       l2norm_embed=l2norm_embed)
            grid = (n_tiles,)
            in_specs = [
                bs((tm, tk_eff), lambda i: (i, 0),
                   pl.Buffered(3) if deep_x else None),
                bs((tk_eff, dim_p), lambda i: (0, 0), pl.Buffered(1)),
                bs((1, dim_p), lambda i: (0, 0), pl.Buffered(1)),
            ]
            out_specs = bs((tm, dim_p), lambda i: (i, 0))
            scratch = []
            dim_sem = ("parallel",)
        else:
            kernel = functools.partial(_linear_embed_kernel_ktiled,
                                       l2norm_embed=l2norm_embed)
            grid = (n_tiles, k_tiles)
            in_specs = [
                bs((tm, tk_eff), lambda i, k: (i, k)),
                bs((tk_eff, dim_p), lambda i, k: (k, 0)),
                bs((1, dim_p), lambda i, k: (0, 0), pl.Buffered(1)),
            ]
            out_specs = bs((tm, dim_p), lambda i, k: (i, 0))
            scratch = [pltpu.VMEM((tm, dim_p), jnp.float32)]
            dim_sem = ("parallel", "arbitrary")

        return pl.pallas_call(
            kernel,
            out_shape=jax.ShapeDtypeStruct((n, dim_p), out_dtype),
            grid_spec=pltpu.PrefetchScalarGridSpec(
                num_scalar_prefetch=0,
                grid=grid,
                in_specs=in_specs,
                out_specs=out_specs,
                scratch_shapes=scratch),
            compiler_params=pltpu.CompilerParams(
                dimension_semantics=dim_sem,
                vmem_limit_bytes=vmem_limit),
            cost_estimate=cost,
        )(x2d, w_t, b2d)

    try:
        out2d = _call(True)
    except Exception:
        # Pipeline-depth hints (pl.Buffered) unsupported on this jax/libtpu
        # combo; retry with default double-buffering (semantics identical).
        out2d = _call(False)

    out = out2d[:, :dim] if pad_dim else out2d
    return out.reshape(*lead_shape, dim)


# ---------------------------------------------------------------------------
# Reference + self-test
# ---------------------------------------------------------------------------

def _reference(x, weight, bias, l2norm_embed):
    y = jnp.einsum("...k,dk->...d", x.astype(jnp.float32),
                   weight.astype(jnp.float32),
                   precision=lax.Precision.HIGHEST) + bias.astype(jnp.float32)
    if l2norm_embed:
        norm = jnp.sqrt(jnp.sum(y * y, axis=-1, keepdims=True))
        y = y / jnp.maximum(norm, 1e-12)
    return y


if __name__ == "__main__":
    key = jax.random.PRNGKey(0)
    kx, kw, kb, kx2, kw2 = jax.random.split(key, 5)

    # 1) Basic small shape: x (batch=2, seq=8, input_dim=32), dim=64, f32.
    batch, seq, input_dim, dim = 2, 8, 32, 64
    x = jax.random.normal(kx, (batch, seq, input_dim), dtype=jnp.float32)
    bound = 1.0 / (input_dim ** 0.5)
    weight = jax.random.uniform(kw, (dim, input_dim), minval=-bound, maxval=bound,
                                dtype=jnp.float32)
    bias = jax.random.uniform(kb, (dim,), minval=-bound, maxval=bound,
                              dtype=jnp.float32)

    for l2 in (False, True):
        out = jax.block_until_ready(linear_embedding(x, weight, bias, l2norm_embed=l2))
        ref = _reference(x, weight, bias, l2)
        assert out.shape == (batch, seq, dim)
        assert jnp.allclose(out, ref, atol=5e-3, rtol=5e-3), f"mismatch (l2={l2})"

    # 2) Ragged row count (n=18, not a multiple of the row tile): exercises the
    #    masked partial last tile (no wrapper-side row padding / output slice).
    xr = jax.random.normal(kx2, (2, 9, input_dim), dtype=jnp.float32)
    outr = jax.block_until_ready(linear_embedding(xr, weight, bias, l2norm_embed=True))
    refr = _reference(xr, weight, bias, True)
    assert outr.shape == (2, 9, dim)
    assert jnp.allclose(outr, refr, atol=5e-3, rtol=5e-3), "mismatch (ragged rows)"

    # 3) Forced K-reduction grid axis (tk=128 over K=256): exercises the
    #    accumulator + pl.when epilogue path used for large-K / v7x shapes.
    K2 = 256
    xk = jax.random.normal(kx, (batch, seq, K2), dtype=jnp.float32)
    bk = 1.0 / (K2 ** 0.5)
    wk = jax.random.uniform(kw2, (dim, K2), minval=-bk, maxval=bk, dtype=jnp.float32)
    outk = jax.block_until_ready(
        linear_embedding(xk, wk, bias, l2norm_embed=True, tk=128))
    refk = _reference(xk, wk, bias, True)
    assert jnp.allclose(outk, refk, atol=5e-3, rtol=5e-3), "mismatch (K-tiled)"

    # 4) bf16 inputs (native MXU dtype, f32 accumulation, bf16 output).
    xb = x.astype(jnp.bfloat16)
    wb = weight.astype(jnp.bfloat16)
    bb = bias.astype(jnp.bfloat16)
    outb = jax.block_until_ready(linear_embedding(xb, wb, bb, l2norm_embed=True))
    refb = _reference(xb, wb, bb, True)
    assert outb.dtype == jnp.bfloat16 and outb.shape == (batch, seq, dim)
    assert jnp.allclose(outb.astype(jnp.float32), refb, atol=3e-2, rtol=3e-2)

    print("KERNEL_OK")
</pallas_src>

<mosaic_0001>
module attributes {stable_mosaic.version = 11 : i64} {
  func.func @_linear_embed_kernel(%arg0: i32, %arg1: memref<16x32xf32, #tpu.memory_space<vmem>>, %arg2: memref<32x128xf32, #tpu.memory_space<vmem>>, %arg3: memref<1x128xf32, #tpu.memory_space<vmem>>, %arg4: memref<16x128xf32, #tpu.memory_space<vmem>>) attributes {dimension_semantics = [#tpu.dimension_semantics<parallel>], iteration_bounds = array<i64: 1>, scalar_prefetch = 0 : i64, scratch_operands = 0 : i64, tpu.core_type = #tpu.core_type<tc>, window_params = [{transform_indices = @transform_0, window_bounds = array<i64: 16, 32>}, {pipeline_mode = #tpu.pipeline_mode<synchronous>, transform_indices = @transform_1, window_bounds = array<i64: 32, 128>}, {pipeline_mode = #tpu.pipeline_mode<synchronous>, transform_indices = @transform_2, window_bounds = array<i64: 1, 128>}, {transform_indices = @transform_3, window_bounds = array<i64: 16, 128>}]} {
    %c0 = arith.constant 0 : index
    %c0_0 = arith.constant 0 : index
    %0 = vector.load %arg1[%c0, %c0_0] : memref<16x32xf32, #tpu.memory_space<vmem>>, vector<16x32xf32>
    %c0_1 = arith.constant 0 : index
    %c0_2 = arith.constant 0 : index
    %1 = vector.load %arg2[%c0_1, %c0_2] : memref<32x128xf32, #tpu.memory_space<vmem>>, vector<32x128xf32>
    %cst = arith.constant dense<0.000000e+00> : vector<16x128xf32>
    %2 = tpu.matmul %0, %1, %cst {dimension_numbers = #tpu.dot_dimension_numbers<[1], [0], [0], [1], [0, 0, 1, 1], [], []>} : vector<16x32xf32>, vector<32x128xf32>, vector<16x128xf32> -> vector<16x128xf32>
    %c0_3 = arith.constant 0 : index
    %c0_4 = arith.constant 0 : index
    %3 = vector.load %arg3[%c0_3, %c0_4] : memref<1x128xf32, #tpu.memory_space<vmem>>, vector<1x128xf32>
    %4 = vector.broadcast %3 : vector<1x128xf32> to vector<16x128xf32>
    %5 = arith.addf %2, %4 : vector<16x128xf32>
    %c0_5 = arith.constant 0 : index
    %c0_6 = arith.constant 0 : index
    %6 = vector.load %arg4[%c0_5, %c0_6] : memref<16x128xf32, #tpu.memory_space<vmem>>, vector<16x128xf32>
    tpu.vector_store %arg4[%c0_5, %c0_6], %5 {strides = array<i32>} : memref<16x128xf32, #tpu.memory_space<vmem>>, vector<16x128xf32>,
    return
  }
  func.func @transform_0(%arg0: i32) -> (i32, i32) {
    %c0_i32 = arith.constant 0 : i32
    %c0_i32_0 = arith.constant 0 : i32
    return %arg0, %c0_i32 : i32, i32
  }
  func.func @transform_1(%arg0: i32) -> (i32, i32) {
    %c0_i32 = arith.constant 0 : i32
    %c0_i32_0 = arith.constant 0 : i32
    %c0_i32_1 = arith.constant 0 : i32
    return %c0_i32, %c0_i32_0 : i32, i32
  }
  func.func @transform_2(%arg0: i32) -> (i32, i32) {
    %c0_i32 = arith.constant 0 : i32
    %c0_i32_0 = arith.constant 0 : i32
    %c0_i32_1 = arith.constant 0 : i32
    return %c0_i32, %c0_i32_0 : i32, i32
  }
  func.func @transform_3(%arg0: i32) -> (i32, i32) {
    %c0_i32 = arith.constant 0 : i32
    %c0_i32_0 = arith.constant 0 : i32
    return %arg0, %c0_i32 : i32, i32
  }
}

module attributes {stable_mosaic.version = 11 : i64} {
  func.func @_linear_embed_kernel(%arg0: i32, %arg1: memref<16x32xf32, #tpu.memory_space<vmem>>, %arg2: memref<32x128xf32, #tpu.memory_space<vmem>>, %arg3: memref<1x128xf32, #tpu.memory_space<vmem>>, %arg4: memref<16x128xf32, #tpu.memory_space<vmem>>) attributes {dimension_semantics = [#tpu.dimension_semantics<parallel>], iteration_bounds = array<i64: 1>, scalar_prefetch = 0 : i64, scratch_operands = 0 : i64, tpu.core_type = #tpu.core_type<tc>, window_params = [{transform_indices = @transform_0, window_bounds = array<i64: 16, 32>}, {pipeline_mode = #tpu.pipeline_mode<synchronous>, transform_indices = @transform_1, window_bounds = array<i64: 32, 128>}, {pipeline_mode = #tpu.pipeline_mode<synchronous>, transform_indices = @transform_2, window_bounds = array<i64: 1, 128>}, {transform_indices = @transform_3, window_bounds = array<i64: 16, 128>}]} {
    %c0 = arith.constant 0 : index
    %c0_0 = arith.constant 0 : index
    %0 = vector.load %arg1[%c0, %c0_0] : memref<16x32xf32, #tpu.memory_space<vmem>>, vector<16x32xf32>
    %c0_1 = arith.constant 0 : index
    %c0_2 = arith.constant 0 : index
    %1 = vector.load %arg2[%c0_1, %c0_2] : memref<32x128xf32, #tpu.memory_space<vmem>>, vector<32x128xf32>
    %cst = arith.constant dense<0.000000e+00> : vector<16x128xf32>
    %2 = tpu.matmul %0, %1, %cst {dimension_numbers = #tpu.dot_dimension_numbers<[1], [0], [0], [1], [0, 0, 1, 1], [], []>} : vector<16x32xf32>, vector<32x128xf32>, vector<16x128xf32> -> vector<16x128xf32>
    %c0_3 = arith.constant 0 : index
    %c0_4 = arith.constant 0 : index
    %3 = vector.load %arg3[%c0_3, %c0_4] : memref<1x128xf32, #tpu.memory_space<vmem>>, vector<1x128xf32>
    %4 = vector.broadcast %3 : vector<1x128xf32> to vector<16x128xf32>
    %5 = arith.addf %2, %4 : vector<16x128xf32>
    %c0_5 = arith.constant 0 : index
    %c0_6 = arith.constant 0 : index
    %6 = vector.load %arg4[%c0_5, %c0_6] : memref<16x128xf32, #tpu.memory_space<vmem>>, vector<16x128xf32>
    tpu.vector_store %arg4[%c0_5, %c0_6], %5 {strides = array<i32>} : memref<16x128xf32, #tpu.memory_space<vmem>>, vector<16x128xf32>,
    return
  }
  func.func @transform_0(%arg0: i32) -> (i32, i32) {
    %c0_i32 = arith.constant 0 : i32
    %c0_i32_0 = arith.constant 0 : i32
    return %arg0, %c0_i32 : i32, i32
  }
  func.func @transform_1(%arg0: i32) -> (i32, i32) {
    %c0_i32 = arith.constant 0 : i32
    %c0_i32_0 = arith.constant 0 : i32
    %c0_i32_1 = arith.constant 0 : i32
    return %c0_i32, %c0_i32_0 : i32, i32
  }
  func.func @transform_2(%arg0: i32) -> (i32, i32) {
    %c0_i32 = arith.constant 0 : i32
    %c0_i32_0 = arith.constant 0 : i32
    %c0_i32_1 = arith.constant 0 : i32
    return %c0_i32, %c0_i32_0 : i32, i32
  }
  func.func @transform_3(%arg0: i32) -> (i32, i32) {
    %c0_i32 = arith.constant 0 : i32
    %c0_i32_0 = arith.constant 0 : i32
    return %arg0, %c0_i32 : i32, i32
  }
}

</mosaic_0001>

<llo_original>
// kernel: tpu_custom_call.1
$region0: #{tpu_custom_call.1}
  #allocation0 [shape = 'u32[]', space=smem, size = 0x4, offset = 0x4, fixed_abs, tag = 'smem constant byte address 0x4 - core index']
  #allocation1 [shape = 'u32[72,128]{1,0:T(1,128)}', space=vmem, size = 0x9000, scoped, tag = 'internal scratch']
  %s0 = inlined_call_operand.hbm [shape: f32[16,32], index: 0, kind: input, shape index: {}]
  %s1 = inlined_call_operand.hbm [shape: f32[32,128], index: 1, kind: input, shape index: {}]
  %s2 = inlined_call_operand.vmem [shape: f32[1,128], index: 2, kind: input, shape index: {}]
  %s3 = inlined_call_operand.hbm [shape: f32[16,128], index: 3, kind: output, shape index: {}]
  %s4 = sld [smem:[#allocation0]]
  $region30: #{tpu_custom_call.1} parent=0
    _
  %s6 = ssub.s32 1, %s4
  %s7 = scalar_select 0, %s6, %s4
  $region1: #{tpu_custom_call.1} parent=0
    #allocation2 [shape = 'u8[8192]{0}', space=vmem, size = 0x2000, scoped, tag = 'input window, operand 0, single buffered']
    #allocation3 [shape = 's32[1]{0}', space=sflag, size = 0x4, scoped, tag = 'scoped memory for tpu_custom_call.1']
    #allocation4 [shape = 's32[1]{0}', space=sflag, size = 0x4, scoped, tag = 'scoped memory for tpu_custom_call.1']
    #allocation5 [shape = 'u8[16384]{0}', space=vmem, size = 0x4000, scoped, tag = 'input window, operand 1, single buffered']
    #allocation6 [shape = 's32[1]{0}', space=sflag, size = 0x4, scoped, tag = 'scoped memory for tpu_custom_call.1']
    #allocation7 [shape = 'u8[8192]{0}', space=vmem, size = 0x2000, scoped, tag = 'output window, operand 0, single buffered']
    %8 = vsyncpa [#allocation3], 0
    %9 = vsyncpa [#allocation6], 0
    %10 = vsyncpa [#allocation4], 0
    // Predicated region
    $region2: #{tpu_custom_call.1} parent=1 // pred_check
      _
    $region3: #{tpu_custom_call.1} parent=1 // pred_check_branch
      %12 = sbr.rel (0) target = $region5
    $region4: #{tpu_custom_call.1} parent=1 // pred_region
      %14 = vsyncadd [#allocation3], 0
      %s15 = sshll.u32 %s0, 4
      %s16 = int_to_ptr.hbm [resolvable:$true] %s15
      %s17 = sshll.u32 [#allocation2], 4
      %s18 = int_to_ptr.vmem [resolvable:$true] %s17
      %23 = dma.hbm_to_vmem [thread:$0]  %s16, 256, %s18, [#allocation3], 128, 128, 8
    $region5: #{tpu_custom_call.1} parent=1 // pred_fallthru
      _
    // Predicated region
    $region6: #{tpu_custom_call.1} parent=1 // pred_check
      _
    $region7: #{tpu_custom_call.1} parent=1 // pred_check_branch
      %25 = sbr.rel (0) target = $region9
    $region8: #{tpu_custom_call.1} parent=1 // pred_region
      %27 = vsyncadd [#allocation6], 0
      %s28 = sshll.u32 %s1, 4
      %s29 = int_to_ptr.hbm [resolvable:$true] %s28
      %s30 = sshll.u32 [#allocation5], 4
      %s31 = int_to_ptr.vmem [resolvable:$true] %s30
      %36 = dma.hbm_to_vmem [thread:$0]  %s29, 512, %s31, [#allocation6], 128, 128, 8
    $region9: #{tpu_custom_call.1} parent=1 // pred_fallthru
      _
    // Predicated region
    $region10: #{tpu_custom_call.1} parent=1 // pred_check
      _
    $region11: #{tpu_custom_call.1} parent=1 // pred_check_branch
      %38 = sbr.rel (0) target = $region13
    $region12: #{tpu_custom_call.1} parent=1 // pred_region
      _
    $region13: #{tpu_custom_call.1} parent=1 // pred_fallthru
      _
    // Predicated region
    $region14: #{tpu_custom_call.1} parent=1 // pred_check
      _
    $region15: #{tpu_custom_call.1} parent=1 // pred_check_branch
      %40 = sbr.rel (0) target = $region17
    $region16: #{tpu_custom_call.1} parent=1 // pred_region
      %42 = dma.done [#allocation3], 256
    $region17: #{tpu_custom_call.1} parent=1 // pred_fallthru
      _
    // Predicated region
    $region18: #{tpu_custom_call.1} parent=1 // pred_check
      _
    $region19: #{tpu_custom_call.1} parent=1 // pred_check_branch
      %44 = sbr.rel (0) target = $region21
    $region20: #{tpu_custom_call.1} parent=1 // pred_region
      %46 = dma.done [#allocation6], 512
    $region21: #{tpu_custom_call.1} parent=1 // pred_fallthru
      _
    %v47 = vld [vmem:[#allocation2] sm:$0xff]
    %v48 = vld [vmem:[#allocation2 + $0x8] sm:$0xff]
    %v49 = vld [vmem:[#allocation5] sm:$0xff]
    %v50 = vld [vmem:[#allocation5 + $0x8] sm:$0xff]
    %v51 = vld [vmem:[#allocation5 + $0x10] sm:$0xff]
    %v52 = vld [vmem:[#allocation5 + $0x18] sm:$0xff]
    %v53 = vld [vmem:[%s2] sm:$0x1]
    %v55 = vperm.slane %v53, 0
    %vm57 = vcmask 261120
    %v59 = vsel %vm57, %v47, 0
    %v62 = vsel %vm57, %v48, 0
    %64 = vmatpush.msra.mxu0 0.0
    %65 = vmatpush.msra.mxu0 0.0
    %66 = vmatpush.msra.mxu0 0.0
    %67 = vmatpush.msra.mxu0 0.0
    %68 = vmatpush.msra.mxu0 0.0
    %69 = vmatpush.msra.mxu0 0.0
    %70 = vmatpush.msra.mxu0 0.0
    %71 = vmatpush.msra.mxu0 0.0
    %72 = vmatpush.msra.mxu0 0.0
    %73 = vmatpush.msra.mxu0 0.0
    %74 = vmatpush.msra.mxu0 0.0
    %75 = vmatpush.msra.mxu0 0.0
    %76 = vmatpush.msra.mxu0 %v52
    %77 = vmatpush.msra.mxu0 %v51
    %78 = vmatpush.msra.mxu0 %v50
    %79 = vmatpush.msra.mxu0 %v49
    %80 = vmatmul.f32.gmra.mxu0 %v59
    %v81 = vpop.f32.mrf.mxu0
    %v82 = vadd.f32 %v55, %v81
    %83 = vmatmul.f32.gmra.mxu0 %v62
    %v84 = vpop.f32.mrf.mxu0
    %v85 = vadd.f32 %v55, %v84
    %86 = vdwg.mxu0
    %87 = vst [vmem:[#allocation7] sm:$0xff] %v82
    %88 = vst [vmem:[#allocation7 + $0x8] sm:$0xff] %v85
    // Predicated region
    $region22: #{tpu_custom_call.1} parent=1 // pred_check
      _
    $region23: #{tpu_custom_call.1} parent=1 // pred_check_branch
      %90 = sbr.rel (0) target = $region25
    $region24: #{tpu_custom_call.1} parent=1 // pred_region
      %92 = vsyncadd [#allocation4], 0
      %s93 = sshll.u32 [#allocation7], 4
      %s94 = int_to_ptr.vmem [resolvable:$true] %s93
      %s95 = sshll.u32 %s3, 4
      %s96 = int_to_ptr.hbm [resolvable:$true] %s95
      %101 = dma.vmem_to_hbm [thread:$0]  %s94, 256, %s96, [#allocation4], 128, 128, 8
    $region25: #{tpu_custom_call.1} parent=1 // pred_fallthru
      _
    // Predicated region
    $region26: #{tpu_custom_call.1} parent=1 // pred_check
      _
    $region27: #{tpu_custom_call.1} parent=1 // pred_check_branch
      %103 = sbr.rel (0) target = $region29
    $region28: #{tpu_custom_call.1} parent=1 // pred_region
      %105 = dma.done [#allocation4], 256
    $region29: #{tpu_custom_call.1} parent=1 // pred_fallthru
      _
    %106 = vsyncpa [#allocation3], 1
    %107 = vsyncpa [#allocation6], 1
    %108 = vsyncpa [#allocation4], 1

// kernel: tpu_custom_call.1
$region0: #{tpu_custom_call.1}
  #allocation0 [shape = 'u32[]', space=smem, size = 0x4, offset = 0x4, fixed_abs, tag = 'smem constant byte address 0x4 - core index']
  #allocation1 [shape = 'u32[72,128]{1,0:T(1,128)}', space=vmem, size = 0x9000, scoped, tag = 'internal scratch']
  %s0 = inlined_call_operand.hbm [shape: f32[16,32], index: 0, kind: input, shape index: {}]
  %s1 = inlined_call_operand.hbm [shape: f32[32,128], index: 1, kind: input, shape index: {}]
  %s2 = inlined_call_operand.vmem [shape: f32[1,128], index: 2, kind: input, shape index: {}]
  %s3 = inlined_call_operand.hbm [shape: f32[16,128], index: 3, kind: output, shape index: {}]
  %s4 = sld [smem:[#allocation0]]
  $region30: #{tpu_custom_call.1} parent=0
    _
  %s6 = ssub.s32 1, %s4
  %s7 = scalar_select 0, %s6, %s4
  $region1: #{tpu_custom_call.1} parent=0
    #allocation2 [shape = 'u8[8192]{0}', space=vmem, size = 0x2000, scoped, tag = 'input window, operand 0, single buffered']
    #allocation3 [shape = 's32[1]{0}', space=sflag, size = 0x4, scoped, tag = 'scoped memory for tpu_custom_call.1']
    #allocation4 [shape = 's32[1]{0}', space=sflag, size = 0x4, scoped, tag = 'scoped memory for tpu_custom_call.1']
    #allocation5 [shape = 'u8[16384]{0}', space=vmem, size = 0x4000, scoped, tag = 'input window, operand 1, single buffered']
    #allocation6 [shape = 's32[1]{0}', space=sflag, size = 0x4, scoped, tag = 'scoped memory for tpu_custom_call.1']
    #allocation7 [shape = 'u8[8192]{0}', space=vmem, size = 0x2000, scoped, tag = 'output window, operand 0, single buffered']
    %8 = vsyncpa [#allocation3], 0
    %9 = vsyncpa [#allocation6], 0
    %10 = vsyncpa [#allocation4], 0
    // Predicated region
    $region2: #{tpu_custom_call.1} parent=1 // pred_check
      _
    $region3: #{tpu_custom_call.1} parent=1 // pred_check_branch
      %12 = sbr.rel (0) target = $region5
    $region4: #{tpu_custom_call.1} parent=1 // pred_region
      %14 = vsyncadd [#allocation3], 0
      %s15 = sshll.u32 %s0, 4
      %s16 = int_to_ptr.hbm [resolvable:$true] %s15
      %s17 = sshll.u32 [#allocation2], 4
      %s18 = int_to_ptr.vmem [resolvable:$true] %s17
      %23 = dma.hbm_to_vmem [thread:$0]  %s16, 256, %s18, [#allocation3], 128, 128, 8
    $region5: #{tpu_custom_call.1} parent=1 // pred_fallthru
      _
    // Predicated region
    $region6: #{tpu_custom_call.1} parent=1 // pred_check
      _
    $region7: #{tpu_custom_call.1} parent=1 // pred_check_branch
      %25 = sbr.rel (0) target = $region9
    $region8: #{tpu_custom_call.1} parent=1 // pred_region
      %27 = vsyncadd [#allocation6], 0
      %s28 = sshll.u32 %s1, 4
      %s29 = int_to_ptr.hbm [resolvable:$true] %s28
      %s30 = sshll.u32 [#allocation5], 4
      %s31 = int_to_ptr.vmem [resolvable:$true] %s30
      %36 = dma.hbm_to_vmem [thread:$0]  %s29, 512, %s31, [#allocation6], 128, 128, 8
    $region9: #{tpu_custom_call.1} parent=1 // pred_fallthru
      _
    // Predicated region
    $region10: #{tpu_custom_call.1} parent=1 // pred_check
      _
    $region11: #{tpu_custom_call.1} parent=1 // pred_check_branch
      %38 = sbr.rel (0) target = $region13
    $region12: #{tpu_custom_call.1} parent=1 // pred_region
      _
    $region13: #{tpu_custom_call.1} parent=1 // pred_fallthru
      _
    // Predicated region
    $region14: #{tpu_custom_call.1} parent=1 // pred_check
      _
    $region15: #{tpu_custom_call.1} parent=1 // pred_check_branch
      %40 = sbr.rel (0) target = $region17
    $region16: #{tpu_custom_call.1} parent=1 // pred_region
      %42 = dma.done [#allocation3], 256
    $region17: #{tpu_custom_call.1} parent=1 // pred_fallthru
      _
    // Predicated region
    $region18: #{tpu_custom_call.1} parent=1 // pred_check
      _
    $region19: #{tpu_custom_call.1} parent=1 // pred_check_branch
      %44 = sbr.rel (0) target = $region21
    $region20: #{tpu_custom_call.1} parent=1 // pred_region
      %46 = dma.done [#allocation6], 512
    $region21: #{tpu_custom_call.1} parent=1 // pred_fallthru
      _
    %v47 = vld [vmem:[#allocation2] sm:$0xff]
    %v48 = vld [vmem:[#allocation2 + $0x8] sm:$0xff]
    %v49 = vld [vmem:[#allocation5] sm:$0xff]
    %v50 = vld [vmem:[#allocation5 + $0x8] sm:$0xff]
    %v51 = vld [vmem:[#allocation5 + $0x10] sm:$0xff]
    %v52 = vld [vmem:[#allocation5 + $0x18] sm:$0xff]
    %v53 = vld [vmem:[%s2] sm:$0x1]
    %v55 = vperm.slane %v53, 0
    %vm57 = vcmask 261120
    %v59 = vsel %vm57, %v47, 0
    %v62 = vsel %vm57, %v48, 0
    %64 = vmatpush.msra.mxu0 0.0
    %65 = vmatpush.msra.mxu0 0.0
    %66 = vmatpush.msra.mxu0 0.0
    %67 = vmatpush.msra.mxu0 0.0
    %68 = vmatpush.msra.mxu0 0.0
    %69 = vmatpush.msra.mxu0 0.0
    %70 = vmatpush.msra.mxu0 0.0
    %71 = vmatpush.msra.mxu0 0.0
    %72 = vmatpush.msra.mxu0 0.0
    %73 = vmatpush.msra.mxu0 0.0
    %74 = vmatpush.msra.mxu0 0.0
    %75 = vmatpush.msra.mxu0 0.0
    %76 = vmatpush.msra.mxu0 %v52
    %77 = vmatpush.msra.mxu0 %v51
    %78 = vmatpush.msra.mxu0 %v50
    %79 = vmatpush.msra.mxu0 %v49
    %80 = vmatmul.f32.gmra.mxu0 %v59
    %v81 = vpop.f32.mrf.mxu0
    %v82 = vadd.f32 %v55, %v81
    %83 = vmatmul.f32.gmra.mxu0 %v62
    %v84 = vpop.f32.mrf.mxu0
    %v85 = vadd.f32 %v55, %v84
    %86 = vdwg.mxu0
    %87 = vst [vmem:[#allocation7] sm:$0xff] %v82
    %88 = vst [vmem:[#allocation7 + $0x8] sm:$0xff] %v85
    // Predicated region
    $region22: #{tpu_custom_call.1} parent=1 // pred_check
      _
    $region23: #{tpu_custom_call.1} parent=1 // pred_check_branch
      %90 = sbr.rel (0) target = $region25
    $region24: #{tpu_custom_call.1} parent=1 // pred_region
      %92 = vsyncadd [#allocation4], 0
      %s93 = sshll.u32 [#allocation7], 4
      %s94 = int_to_ptr.vmem [resolvable:$true] %s93
      %s95 = sshll.u32 %s3, 4
      %s96 = int_to_ptr.hbm [resolvable:$true] %s95
      %101 = dma.vmem_to_hbm [thread:$0]  %s94, 256, %s96, [#allocation4], 128, 128, 8
    $region25: #{tpu_custom_call.1} parent=1 // pred_fallthru
      _
    // Predicated region
    $region26: #{tpu_custom_call.1} parent=1 // pred_check
      _
    $region27: #{tpu_custom_call.1} parent=1 // pred_check_branch
      %103 = sbr.rel (0) target = $region29
    $region28: #{tpu_custom_call.1} parent=1 // pred_region
      %105 = dma.done [#allocation4], 256
    $region29: #{tpu_custom_call.1} parent=1 // pred_fallthru
      _
    %106 = vsyncpa [#allocation3], 1
    %107 = vsyncpa [#allocation6], 1
    %108 = vsyncpa [#allocation4], 1

</llo_original>
